<compile_context>
chip_gen: v5e
topology: v5e:2x2
jax: 0.10.0
libtpu: 0.0.40
codegen_flags: <defaults>
</compile_context>

<pallas_src>
import functools

import jax
import jax.numpy as jnp
from jax import lax
from jax.experimental import pallas as pl
from jax.experimental.pallas import tpu as pltpu


# --------------------------------------------------------------------------
# Kernel bodies
# --------------------------------------------------------------------------
def _keep(m):
    # Works for bool masks (passed straight through, no astype) and int masks.
    return m if m.dtype == jnp.bool_ else (m != 0)


def _masked_x_f32(x_ref, m_ref):
    fill = jnp.finfo(x_ref.dtype).min           # torch.finfo(x.dtype).min
    x = x_ref[...]
    if m_ref is not None:
        x = jnp.where(_keep(m_ref[...]), x, fill)
    return x.astype(jnp.float32)


def _finish_softmax(e, s, o_ref):
    # fill - max can be -inf for partially-masked rows; exp(-inf)=0 so the
    # result is still exact (only intermediate infs, never NaNs in live rows).
    inv = pl.reciprocal(s, approx=True)          # EUP slot (free next to exp)
    inv = inv * (2.0 - s * inv)                  # one Newton step -> ~1 ulp
    o_ref[...] = (e * inv).astype(o_ref.dtype)


def _softmax_kernel(x_ref, o_ref):
    x = _masked_x_f32(x_ref, None)
    mx = jnp.max(x, axis=-1, keepdims=True)
    e = jnp.exp(x - mx)
    _finish_softmax(e, jnp.sum(e, axis=-1, keepdims=True), o_ref)


def _masked_softmax_kernel(x_ref, m_ref, o_ref):
    x = _masked_x_f32(x_ref, m_ref)
    mx = jnp.max(x, axis=-1, keepdims=True)
    e = jnp.exp(x - mx)
    _finish_softmax(e, jnp.sum(e, axis=-1, keepdims=True), o_ref)


# ---- L-tiled (online softmax) two-pass path --------------------------------
def _stats_kernel(*refs, l_total, l_tile, has_mask):
    # Pass 1: running max (m) and running sum of exp (l) over L chunks.
    if has_mask:
        x_ref, m_ref, m_out, l_out, m_sc, l_sc = refs
    else:
        x_ref, m_out, l_out, m_sc, l_sc = refs
        m_ref = None
    li = pl.program_id(1)

    @pl.when(li == 0)
    def _():
        m_sc[...] = jnp.full_like(m_sc, -jnp.inf)
        l_sc[...] = jnp.zeros_like(l_sc)

    x = _masked_x_f32(x_ref, m_ref)
    if l_total % l_tile != 0:
        # Ragged last L chunk: neutralize padded lanes so they cannot affect
        # the max (set to -inf) or the sum (exp(-inf - m_new) == 0).
        col = li * l_tile + lax.broadcasted_iota(jnp.int32, x.shape, 1)
        x = jnp.where(col < l_total, x, -jnp.inf)

    m_new = jnp.maximum(m_sc[...], jnp.max(x, axis=-1, keepdims=True))
    l_sc[...] = (jnp.exp(m_sc[...] - m_new) * l_sc[...]
                 + jnp.sum(jnp.exp(x - m_new), axis=-1, keepdims=True))
    m_sc[...] = m_new

    @pl.when(li == pl.num_programs(1) - 1)
    def _():
        m_out[...] = m_sc[...]
        l_out[...] = l_sc[...]


def _normalize_kernel(*refs, has_mask):
    # Pass 2: exp(x - m) / l, re-reading x one chunk at a time.
    if has_mask:
        x_ref, m_ref, mx_ref, l_ref, o_ref = refs
    else:
        x_ref, mx_ref, l_ref, o_ref = refs
        m_ref = None
    x = _masked_x_f32(x_ref, m_ref)
    e = jnp.exp(x - mx_ref[...])
    _finish_softmax(e, l_ref[...], o_ref)


# --------------------------------------------------------------------------
# Generation-aware budgets & tile selection
# --------------------------------------------------------------------------
def _tpu_vmem_budgets():
    try:
        cap = int(pltpu.get_tpu_info().vmem_capacity_bytes)
    except Exception:
        cap = 64 << 20                     # conservative fallback (v7x-sized)
    vmem_limit = (cap * 3) // 4            # ~48 MiB v7x, ~96 MiB v5e/v6e
    return vmem_limit // 2, vmem_limit     # (tile budget, scoped vmem limit)


def _round_rows(rt):
    if rt >= 32:
        return rt - rt % 32                # bool/int8 (32,128) packing
    return max(rt - rt % 8, 8)


def _pick_row_tile(N, L, itemsize, has_mask, tile_budget_bytes):
    """Rows per block for the single-pass path, or None if L-tiling is needed."""
    mask_b = 1 if has_mask else 0
    # Double-buffered x + out (+ 1-byte mask), plus ~8 B/elem of
    # single-buffered in-kernel f32 temporaries (x_f32, e).
    per_elem = 2 * (2 * itemsize + mask_b) + 8
    max_rows = int(tile_budget_bytes // (per_elem * L))
    if max_rows < 8:
        return None                        # even 8 rows x L overflow -> L-tile
    if N <= max_rows:
        return N                           # one full block (no (8,_) constraint)
    rt = _round_rows(min(max_rows, 4096))
    # Keep >= 4 grid steps (pipelining + v7x megacore), but never shrink a
    # block below ~2 MiB of x traffic -- fixed per-step overhead dominates.
    min_rows = max(_round_rows(max(int((2 << 20) // (itemsize * L)), 8)), 32)
    while rt >= 2 * min_rows and pl.cdiv(N, rt) < 4:
        rt //= 2
    return _round_rows(rt)


def _pick_l_tiles(N, L, itemsize, has_mask, tile_budget_bytes):
    mask_b = 1 if has_mask else 0
    per_elem = 2 * (2 * itemsize + mask_b) + 8     # pass-2 footprint dominates
    rt = N if N <= 256 else 256
    lt = int(tile_budget_bytes // (per_elem * max(rt, 1)))
    lt = max((lt // 128) * 128, 128)
    lt = min(lt, L)
    return rt, lt


# --------------------------------------------------------------------------
# Wrapper
# --------------------------------------------------------------------------
def masked_softmax_1d(x, mask=None, *, row_tile=None, l_tile=None,
                      vmem_limit_bytes=None, tile_budget_bytes=None):
    """Pallas equivalent of MaskedSoftmax1d(dim=-1).forward(x, mask).

    x: (N, L) float array.  mask: optional (N, L) bool array (True = keep).
    """
    N, L = x.shape
    has_mask = mask is not None
    itemsize = jnp.dtype(x.dtype).itemsize

    auto_budget, auto_limit = _tpu_vmem_budgets()
    if vmem_limit_bytes is None:
        vmem_limit_bytes = auto_limit
    if tile_budget_bytes is None:
        tile_budget_bytes = auto_budget

    use_ltiled = l_tile is not None
    if not use_ltiled and row_tile is None:
        row_tile = _pick_row_tile(N, L, itemsize, has_mask, tile_budget_bytes)
        use_ltiled = row_tile is None

    cost = pl.CostEstimate(
        flops=5 * N * L,
        transcendentals=N * L,
        bytes_accessed=2 * N * L * itemsize + (N * L if has_mask else 0),
    )
    out_shape = jax.ShapeDtypeStruct((N, L), x.dtype)

    # ---- single-pass path: one (row_tile, L) block per grid step -----------
    if not use_ltiled:
        row_tile = min(row_tile, N)
        grid = (pl.cdiv(N, row_tile),)
        spec = pl.BlockSpec((row_tile, L), lambda i: (i, 0))
        params = pltpu.CompilerParams(
            dimension_semantics=("parallel",),      # megacore shards rows
            vmem_limit_bytes=vmem_limit_bytes)
        if has_mask:
            return pl.pallas_call(
                _masked_softmax_kernel,
                out_shape=out_shape,
                grid_spec=pltpu.PrefetchScalarGridSpec(
                    num_scalar_prefetch=0, grid=grid,
                    in_specs=[spec, spec], out_specs=spec),
                compiler_params=params,
                cost_estimate=cost,
            )(x, mask)                               # bool mask passed as-is
        return pl.pallas_call(
            _softmax_kernel,
            out_shape=out_shape,
            grid_spec=pltpu.PrefetchScalarGridSpec(
                num_scalar_prefetch=0, grid=grid,
                in_specs=[spec], out_specs=spec),
            compiler_params=params,
            cost_estimate=cost,
        )(x)

    # ---- L-tiled two-pass online-softmax path -------------------------------
    if row_tile is None or l_tile is None:
        auto_rt, auto_lt = _pick_l_tiles(N, L, itemsize, has_mask,
                                         tile_budget_bytes)
        row_tile = auto_rt if row_tile is None else row_tile
        l_tile = auto_lt if l_tile is None else l_tile
    row_tile = min(row_tile, N)
    l_tile = min(l_tile, L)

    grid = (pl.cdiv(N, row_tile), pl.cdiv(L, l_tile))
    x_spec = pl.BlockSpec((row_tile, l_tile), lambda i, l: (i, l))
    stat_spec = pl.BlockSpec((row_tile, 1), lambda i, l: (i, 0))
    in_specs = [x_spec, x_spec] if has_mask else [x_spec]
    operands = (x, mask) if has_mask else (x,)

    # Pass 1: per-row max and sum-of-exp (reduction axis last, "arbitrary").
    m_stats, l_stats = pl.pallas_call(
        functools.partial(_stats_kernel, l_total=L, l_tile=l_tile,
                          has_mask=has_mask),
        out_shape=(jax.ShapeDtypeStruct((N, 1), jnp.float32),
                   jax.ShapeDtypeStruct((N, 1), jnp.float32)),
        grid_spec=pltpu.PrefetchScalarGridSpec(
            num_scalar_prefetch=0, grid=grid,
            in_specs=in_specs,
            out_specs=[stat_spec, stat_spec],
            scratch_shapes=[pltpu.VMEM((row_tile, 1), jnp.float32)] * 2),
        compiler_params=pltpu.CompilerParams(
            dimension_semantics=("parallel", "arbitrary"),
            vmem_limit_bytes=vmem_limit_bytes),
        cost_estimate=cost,
    )(*operands)

    # Pass 2: normalize each chunk with the finished stats.
    return pl.pallas_call(
        functools.partial(_normalize_kernel, has_mask=has_mask),
        out_shape=out_shape,
        grid_spec=pltpu.PrefetchScalarGridSpec(
            num_scalar_prefetch=0, grid=grid,
            in_specs=in_specs + [stat_spec, stat_spec],
            out_specs=x_spec),
        compiler_params=pltpu.CompilerParams(
            dimension_semantics=("parallel", "parallel"),
            vmem_limit_bytes=vmem_limit_bytes),
        cost_estimate=cost,
    )(*operands, m_stats, l_stats)


# --------------------------------------------------------------------------
# Pure-JAX reference mirroring the PyTorch module (f32 softmax accumulation)
# --------------------------------------------------------------------------
def _reference(x, mask):
    xf = x if mask is None else jnp.where(mask, x, jnp.finfo(x.dtype).min)
    return jax.nn.softmax(xf.astype(jnp.float32), axis=-1).astype(x.dtype)


if __name__ == "__main__":
    key = jax.random.PRNGKey(0)
    k1, k2, k3, k4, k5, k6 = jax.random.split(key, 6)

    # 1) f32 masked, single full-row block (auto tiling), bool mask passthrough
    N, L = 64, 256
    x = jax.random.normal(k1, (N, L), dtype=jnp.float32)
    mask = jax.random.bernoulli(k2, p=0.7, shape=(N, L))
    out = jax.block_until_ready(masked_softmax_1d(x, mask))
    assert out.shape == (N, L) and out.dtype == x.dtype
    assert jnp.allclose(out, _reference(x, mask), atol=3e-6, rtol=1e-5)

    # 2) mask=None specialized path (no synthesized mask traffic)
    out_nm = jax.block_until_ready(masked_softmax_1d(x))
    assert jnp.allclose(out_nm, _reference(x, None), atol=3e-6, rtol=1e-5)

    # 3) ragged row grid (N % row_tile != 0), masked f32
    N2 = 50
    x2 = jax.random.normal(k3, (N2, L), dtype=jnp.float32)
    mask2 = jax.random.bernoulli(k4, p=0.6, shape=(N2, L))
    out2 = jax.block_until_ready(masked_softmax_1d(x2, mask2, row_tile=32))
    assert jnp.allclose(out2, _reference(x2, mask2), atol=3e-6, rtol=1e-5)

    # 4) bf16 input, auto tiling
    xb = jax.random.normal(k5, (24, 128), dtype=jnp.bfloat16)
    maskb = jax.random.bernoulli(k6, p=0.6, shape=(24, 128))
    outb = jax.block_until_ready(masked_softmax_1d(xb, maskb))
    assert outb.dtype == jnp.bfloat16
    assert jnp.allclose(outb.astype(jnp.float32),
                        _reference(xb, maskb).astype(jnp.float32),
                        atol=1e-2, rtol=1e-2)

    # 5) forced L-tiled online-softmax path: ragged rows AND ragged lanes
    N3, L3 = 40, 500
    x3 = jax.random.normal(k1, (N3, L3), dtype=jnp.float32)
    mask3 = jax.random.bernoulli(k2, p=0.65, shape=(N3, L3))
    out3 = jax.block_until_ready(
        masked_softmax_1d(x3, mask3, row_tile=32, l_tile=128))
    assert jnp.allclose(out3, _reference(x3, mask3), atol=3e-6, rtol=1e-5)

    print("KERNEL_OK")
</pallas_src>

<mosaic_0001>
module attributes {stable_mosaic.version = 11 : i64} {
  func.func @_masked_softmax_kernel(%arg0: i32, %arg1: memref<64x256xf32, #tpu.memory_space<vmem>>, %arg2: memref<64x256xi32, #tpu.memory_space<vmem>>, %arg3: memref<64x256xf32, #tpu.memory_space<vmem>>) attributes {dimension_semantics = [#tpu.dimension_semantics<parallel>], iteration_bounds = array<i64: 1>, scalar_prefetch = 0 : i64, scratch_operands = 0 : i64, tpu.core_type = #tpu.core_type<tc>, window_params = [{transform_indices = @transform_0, window_bounds = array<i64: 64, 256>}, {transform_indices = @transform_1, window_bounds = array<i64: 64, 256>}, {transform_indices = @transform_2, window_bounds = array<i64: 64, 256>}]} {
    %c0 = arith.constant 0 : index
    %c0_0 = arith.constant 0 : index
    %0 = vector.load %arg1[%c0, %c0_0] : memref<64x256xf32, #tpu.memory_space<vmem>>, vector<64x256xf32>
    %c0_1 = arith.constant 0 : index
    %c0_2 = arith.constant 0 : index
    %1 = vector.load %arg2[%c0_1, %c0_2] : memref<64x256xi32, #tpu.memory_space<vmem>>, vector<64x256xi32>
    %cst = arith.constant dense<0> : vector<64x256xi32>
    %2 = arith.cmpi ne, %1, %cst : vector<64x256xi32>
    %cst_3 = arith.constant -3.40282347E+38 : f32
    %3 = vector.broadcast %cst_3 : f32 to vector<64x256xf32>
    %4 = arith.select %2, %0, %3 : vector<64x256xi1>, vector<64x256xf32>
    %cst_4 = arith.constant dense<0xFF800000> : vector<64xf32>
    %5 = vector.multi_reduction <maximumf>, %4, %cst_4 [1] : vector<64x256xf32> to vector<64xf32>
    %6 = vector.shape_cast %5 : vector<64xf32> to vector<64x1xf32>
    %7 = vector.broadcast %6 : vector<64x1xf32> to vector<64x256xf32>
    %8 = arith.subf %4, %7 : vector<64x256xf32>
    %9 = math.exp %8 : vector<64x256xf32>
    %cst_5 = arith.constant dense<0.000000e+00> : vector<64xf32>
    %10 = vector.multi_reduction <add>, %9, %cst_5 [1] : vector<64x256xf32> to vector<64xf32>
    %11 = vector.shape_cast %10 : vector<64xf32> to vector<64x1xf32>
    %12 = tpu.reciprocal %11 {approx = true} : vector<64x1xf32> -> vector<64x1xf32>
    %13 = arith.mulf %11, %12 : vector<64x1xf32>
    %cst_6 = arith.constant 2.000000e+00 : f32
    %14 = vector.broadcast %cst_6 : f32 to vector<64x1xf32>
    %15 = arith.subf %14, %13 : vector<64x1xf32>
    %16 = arith.mulf %12, %15 : vector<64x1xf32>
    %17 = vector.broadcast %16 : vector<64x1xf32> to vector<64x256xf32>
    %18 = arith.mulf %9, %17 : vector<64x256xf32>
    %c0_7 = arith.constant 0 : index
    %c0_8 = arith.constant 0 : index
    %19 = vector.load %arg3[%c0_7, %c0_8] : memref<64x256xf32, #tpu.memory_space<vmem>>, vector<64x256xf32>
    tpu.vector_store %arg3[%c0_7, %c0_8], %18 {strides = array<i32>} : memref<64x256xf32, #tpu.memory_space<vmem>>, vector<64x256xf32>,
    return
  }
  func.func @transform_0(%arg0: i32) -> (i32, i32) {
    %c0_i32 = arith.constant 0 : i32
    %c0_i32_0 = arith.constant 0 : i32
    return %arg0, %c0_i32 : i32, i32
  }
  func.func @transform_1(%arg0: i32) -> (i32, i32) {
    %c0_i32 = arith.constant 0 : i32
    %c0_i32_0 = arith.constant 0 : i32
    return %arg0, %c0_i32 : i32, i32
  }
  func.func @transform_2(%arg0: i32) -> (i32, i32) {
    %c0_i32 = arith.constant 0 : i32
    %c0_i32_0 = arith.constant 0 : i32
    return %arg0, %c0_i32 : i32, i32
  }
}

</mosaic_0001>

<llo_original>
// kernel: tpu_custom_call.1
$region0: #{tpu_custom_call.1}
  #allocation0 [shape = 'u32[]', space=smem, size = 0x4, offset = 0x4, fixed_abs, tag = 'smem constant byte address 0x4 - core index']
  #allocation1 [shape = 'u32[72,128]{1,0:T(1,128)}', space=vmem, size = 0x9000, scoped, tag = 'internal scratch']
  %s0 = inlined_call_operand.vmem [shape: f32[64,256], index: 0, kind: input, shape index: {}]
  %s1 = inlined_call_operand.vmem [shape: s32[64,256], index: 1, kind: input, shape index: {}]
  %s2 = inlined_call_operand.hbm [shape: f32[64,256], index: 2, kind: output, shape index: {}]
  %s3 = sld [smem:[#allocation0]]
  $region18: #{tpu_custom_call.1} parent=0
    _
  %s5 = ssub.s32 1, %s3
  %s6 = scalar_select 0, %s5, %s3
  $region1: #{tpu_custom_call.1} parent=0
    #allocation2 [shape = 'u8[65536]{0}', space=vmem, size = 0x10000, scoped, tag = 'output window, operand 0, single buffered']
    #allocation3 [shape = 's32[1]{0}', space=sflag, size = 0x4, scoped, tag = 'scoped memory for tpu_custom_call.1']
    %7 = vsyncpa [#allocation3], 0
    // Predicated region
    $region2: #{tpu_custom_call.1} parent=1 // pred_check
      _
    $region3: #{tpu_custom_call.1} parent=1 // pred_check_branch
      %9 = sbr.rel (0) target = $region5
    $region4: #{tpu_custom_call.1} parent=1 // pred_region
      _
    $region5: #{tpu_custom_call.1} parent=1 // pred_fallthru
      _
    // Predicated region
    $region6: #{tpu_custom_call.1} parent=1 // pred_check
      _
    $region7: #{tpu_custom_call.1} parent=1 // pred_check_branch
      %11 = sbr.rel (0) target = $region9
    $region8: #{tpu_custom_call.1} parent=1 // pred_region
      _
    $region9: #{tpu_custom_call.1} parent=1 // pred_fallthru
      _
    %v12 = vld [vmem:[%s0] sm:$0xff]
    %v13 = vld [vmem:[%s0 + $0x8] sm:$0xff]
    %v14 = vld [vmem:[%s0 + $0x10] sm:$0xff]
    %v15 = vld [vmem:[%s0 + $0x18] sm:$0xff]
    %v16 = vld [vmem:[%s0 + $0x20] sm:$0xff]
    %v17 = vld [vmem:[%s0 + $0x28] sm:$0xff]
    %v18 = vld [vmem:[%s0 + $0x30] sm:$0xff]
    %v19 = vld [vmem:[%s0 + $0x38] sm:$0xff]
    %v20 = vld [vmem:[%s0 + $0x40] sm:$0xff]
    %v21 = vld [vmem:[%s0 + $0x48] sm:$0xff]
    %v22 = vld [vmem:[%s0 + $0x50] sm:$0xff]
    %v23 = vld [vmem:[%s0 + $0x58] sm:$0xff]
    %v24 = vld [vmem:[%s0 + $0x60] sm:$0xff]
    %v25 = vld [vmem:[%s0 + $0x68] sm:$0xff]
    %v26 = vld [vmem:[%s0 + $0x70] sm:$0xff]
    %v27 = vld [vmem:[%s0 + $0x78] sm:$0xff]
    %v28 = vld [vmem:[%s1] sm:$0xff]
    %v29 = vld [vmem:[%s1 + $0x8] sm:$0xff]
    %v30 = vld [vmem:[%s1 + $0x10] sm:$0xff]
    %v31 = vld [vmem:[%s1 + $0x18] sm:$0xff]
    %v32 = vld [vmem:[%s1 + $0x20] sm:$0xff]
    %v33 = vld [vmem:[%s1 + $0x28] sm:$0xff]
    %v34 = vld [vmem:[%s1 + $0x30] sm:$0xff]
    %v35 = vld [vmem:[%s1 + $0x38] sm:$0xff]
    %v36 = vld [vmem:[%s1 + $0x40] sm:$0xff]
    %v37 = vld [vmem:[%s1 + $0x48] sm:$0xff]
    %v38 = vld [vmem:[%s1 + $0x50] sm:$0xff]
    %v39 = vld [vmem:[%s1 + $0x58] sm:$0xff]
    %v40 = vld [vmem:[%s1 + $0x60] sm:$0xff]
    %v41 = vld [vmem:[%s1 + $0x68] sm:$0xff]
    %v42 = vld [vmem:[%s1 + $0x70] sm:$0xff]
    %v43 = vld [vmem:[%s1 + $0x78] sm:$0xff]
    %vm44 = vcmp.ne.s32.totalorder %v28, 0
    %vm45 = vcmp.ne.s32.totalorder %v29, 0
    %vm46 = vcmp.ne.s32.totalorder %v30, 0
    %vm47 = vcmp.ne.s32.totalorder %v31, 0
    %vm48 = vcmp.ne.s32.totalorder %v32, 0
    %vm49 = vcmp.ne.s32.totalorder %v33, 0
    %vm50 = vcmp.ne.s32.totalorder %v34, 0
    %vm51 = vcmp.ne.s32.totalorder %v35, 0
    %vm52 = vcmp.ne.s32.totalorder %v36, 0
    %vm53 = vcmp.ne.s32.totalorder %v37, 0
    %vm54 = vcmp.ne.s32.totalorder %v38, 0
    %vm55 = vcmp.ne.s32.totalorder %v39, 0
    %vm56 = vcmp.ne.s32.totalorder %v40, 0
    %vm57 = vcmp.ne.s32.totalorder %v41, 0
    %vm58 = vcmp.ne.s32.totalorder %v42, 0
    %vm59 = vcmp.ne.s32.totalorder %v43, 0
    %v60 = vsel %vm44, %v12, -3.4028235e+38
    %v61 = vsel %vm45, %v13, -3.4028235e+38
    %v62 = vsel %vm46, %v14, -3.4028235e+38
    %v63 = vsel %vm47, %v15, -3.4028235e+38
    %v64 = vsel %vm48, %v16, -3.4028235e+38
    %v65 = vsel %vm49, %v17, -3.4028235e+38
    %v66 = vsel %vm50, %v18, -3.4028235e+38
    %v67 = vsel %vm51, %v19, -3.4028235e+38
    %v68 = vsel %vm52, %v20, -3.4028235e+38
    %v69 = vsel %vm53, %v21, -3.4028235e+38
    %v70 = vsel %vm54, %v22, -3.4028235e+38
    %v71 = vsel %vm55, %v23, -3.4028235e+38
    %v72 = vsel %vm56, %v24, -3.4028235e+38
    %v73 = vsel %vm57, %v25, -3.4028235e+38
    %v74 = vsel %vm58, %v26, -3.4028235e+38
    %v75 = vsel %vm59, %v27, -3.4028235e+38
    %v76 = vmax.f32 %v60, %v61
    %77 = vmax.xlane.f32.xlu0 %v76
    %v78 = vpop.xlane.xlu0 %77
    %v79 = vmax.f32 %v62, %v63
    %80 = vmax.xlane.f32.xlu0 %v79
    %v81 = vpop.xlane.xlu0 %80
    %v82 = vmax.f32 %v64, %v65
    %83 = vmax.xlane.f32.xlu0 %v82
    %v84 = vpop.xlane.xlu0 %83
    %v85 = vmax.f32 %v66, %v67
    %86 = vmax.xlane.f32.xlu0 %v85
    %v87 = vpop.xlane.xlu0 %86
    %v88 = vmax.f32 %v68, %v69
    %89 = vmax.xlane.f32.xlu0 %v88
    %v90 = vpop.xlane.xlu0 %89
    %v91 = vmax.f32 %v70, %v71
    %92 = vmax.xlane.f32.xlu0 %v91
    %v93 = vpop.xlane.xlu0 %92
    %v94 = vmax.f32 %v72, %v73
    %95 = vmax.xlane.f32.xlu0 %v94
    %v96 = vpop.xlane.xlu0 %95
    %v97 = vmax.f32 %v74, %v75
    %98 = vmax.xlane.f32.xlu0 %v97
    %v99 = vpop.xlane.xlu0 %98
    %v100 = vsub.f32 %v60, %v78
    %v101 = vsub.f32 %v61, %v78
    %v102 = vsub.f32 %v62, %v81
    %v103 = vsub.f32 %v63, %v81
    %v104 = vsub.f32 %v64, %v84
    %v105 = vsub.f32 %v65, %v84
    %v106 = vsub.f32 %v66, %v87
    %v107 = vsub.f32 %v67, %v87
    %v108 = vsub.f32 %v68, %v90
    %v109 = vsub.f32 %v69, %v90
    %v110 = vsub.f32 %v70, %v93
    %v111 = vsub.f32 %v71, %v93
    %v112 = vsub.f32 %v72, %v96
    %v113 = vsub.f32 %v73, %v96
    %v114 = vsub.f32 %v74, %v99
    %v115 = vsub.f32 %v75, %v99
    %v116 = vmul.f32 %v100, 1.442695
    %v117 = vpow.pop %v116
    %v118 = vmul.f32 %v101, 1.442695
    %v119 = vpow.pop %v118
    %v120 = vmul.f32 %v102, 1.442695
    %v121 = vpow.pop %v120
    %v122 = vmul.f32 %v103, 1.442695
    %v123 = vpow.pop %v122
    %v124 = vmul.f32 %v104, 1.442695
    %v125 = vpow.pop %v124
    %v126 = vmul.f32 %v105, 1.442695
    %v127 = vpow.pop %v126
    %v128 = vmul.f32 %v106, 1.442695
    %v129 = vpow.pop %v128
    %v130 = vmul.f32 %v107, 1.442695
    %v131 = vpow.pop %v130
    %v132 = vmul.f32 %v108, 1.442695
    %v133 = vpow.pop %v132
    %v134 = vmul.f32 %v109, 1.442695
    %v135 = vpow.pop %v134
    %v136 = vmul.f32 %v110, 1.442695
    %v137 = vpow.pop %v136
    %v138 = vmul.f32 %v111, 1.442695
    %v139 = vpow.pop %v138
    %v140 = vmul.f32 %v112, 1.442695
    %v141 = vpow.pop %v140
    %v142 = vmul.f32 %v113, 1.442695
    %v143 = vpow.pop %v142
    %v144 = vmul.f32 %v114, 1.442695
    %v145 = vpow.pop %v144
    %v146 = vmul.f32 %v115, 1.442695
    %v147 = vpow.pop %v146
    %v148 = vadd.f32 %v117, %v119
    %149 = vadd.xlane.f32.xlu0 %v148
    %v150 = vpop.xlane.xlu0 %149
    %v151 = vadd.f32 %v121, %v123
    %152 = vadd.xlane.f32.xlu0 %v151
    %v153 = vpop.xlane.xlu0 %152
    %v154 = vadd.f32 %v125, %v127
    %155 = vadd.xlane.f32.xlu0 %v154
    %v156 = vpop.xlane.xlu0 %155
    %v157 = vadd.f32 %v129, %v131
    %158 = vadd.xlane.f32.xlu0 %v157
    %v159 = vpop.xlane.xlu0 %158
    %v160 = vadd.f32 %v133, %v135
    %161 = vadd.xlane.f32.xlu0 %v160
    %v162 = vpop.xlane.xlu0 %161
    %v163 = vadd.f32 %v137, %v139
    %164 = vadd.xlane.f32.xlu0 %v163
    %v165 = vpop.xlane.xlu0 %164
    %v166 = vadd.f32 %v141, %v143
    %167 = vadd.xlane.f32.xlu0 %v166
    %v168 = vpop.xlane.xlu0 %167
    %v169 = vadd.f32 %v145, %v147
    %170 = vadd.xlane.f32.xlu0 %v169
    %v171 = vpop.xlane.xlu0 %170
    %v172 = vrcp.pop %v150
    %v173 = vrcp.pop %v153
    %v174 = vrcp.pop %v156
    %v175 = vrcp.pop %v159
    %v176 = vrcp.pop %v162
    %v177 = vrcp.pop %v165
    %v178 = vrcp.pop %v168
    %v179 = vrcp.pop %v171
    %v180 = vmul.f32 %v150, %v172
    %v181 = vmul.f32 %v153, %v173
    %v182 = vmul.f32 %v156, %v174
    %v183 = vmul.f32 %v159, %v175
    %v184 = vmul.f32 %v162, %v176
    %v185 = vmul.f32 %v165, %v177
    %v186 = vmul.f32 %v168, %v178
    %v187 = vmul.f32 %v171, %v179
    %v188 = vsub.f32 2.0, %v180
    %v189 = vsub.f32 2.0, %v181
    %v190 = vsub.f32 2.0, %v182
    %v191 = vsub.f32 2.0, %v183
    %v192 = vsub.f32 2.0, %v184
    %v193 = vsub.f32 2.0, %v185
    %v194 = vsub.f32 2.0, %v186
    %v195 = vsub.f32 2.0, %v187
    %v196 = vmul.f32 %v172, %v188
    %v197 = vmul.f32 %v173, %v189
    %v198 = vmul.f32 %v174, %v190
    %v199 = vmul.f32 %v175, %v191
    %v200 = vmul.f32 %v176, %v192
    %v201 = vmul.f32 %v177, %v193
    %v202 = vmul.f32 %v178, %v194
    %v203 = vmul.f32 %v179, %v195
    %v204 = vmul.f32 %v117, %v196
    %v205 = vmul.f32 %v119, %v196
    %v206 = vmul.f32 %v121, %v197
    %v207 = vmul.f32 %v123, %v197
    %v208 = vmul.f32 %v125, %v198
    %v209 = vmul.f32 %v127, %v198
    %v210 = vmul.f32 %v129, %v199
    %v211 = vmul.f32 %v131, %v199
    %v212 = vmul.f32 %v133, %v200
    %v213 = vmul.f32 %v135, %v200
    %v214 = vmul.f32 %v137, %v201
    %v215 = vmul.f32 %v139, %v201
    %v216 = vmul.f32 %v141, %v202
    %v217 = vmul.f32 %v143, %v202
    %v218 = vmul.f32 %v145, %v203
    %v219 = vmul.f32 %v147, %v203
    %220 = vst [vmem:[#allocation2] sm:$0xff] %v204
    %221 = vst [vmem:[#allocation2 + $0x8] sm:$0xff] %v205
    %222 = vst [vmem:[#allocation2 + $0x10] sm:$0xff] %v206
    %223 = vst [vmem:[#allocation2 + $0x18] sm:$0xff] %v207
    %224 = vst [vmem:[#allocation2 + $0x20] sm:$0xff] %v208
    %225 = vst [vmem:[#allocation2 + $0x28] sm:$0xff] %v209
    %226 = vst [vmem:[#allocation2 + $0x30] sm:$0xff] %v210
    %227 = vst [vmem:[#allocation2 + $0x38] sm:$0xff] %v211
    %228 = vst [vmem:[#allocation2 + $0x40] sm:$0xff] %v212
    %229 = vst [vmem:[#allocation2 + $0x48] sm:$0xff] %v213
    %230 = vst [vmem:[#allocation2 + $0x50] sm:$0xff] %v214
    %231 = vst [vmem:[#allocation2 + $0x58] sm:$0xff] %v215
    %232 = vst [vmem:[#allocation2 + $0x60] sm:$0xff] %v216
    %233 = vst [vmem:[#allocation2 + $0x68] sm:$0xff] %v217
    %234 = vst [vmem:[#allocation2 + $0x70] sm:$0xff] %v218
    %235 = vst [vmem:[#allocation2 + $0x78] sm:$0xff] %v219
    // Predicated region
    $region10: #{tpu_custom_call.1} parent=1 // pred_check
      _
    $region11: #{tpu_custom_call.1} parent=1 // pred_check_branch
      %237 = sbr.rel (0) target = $region13
    $region12: #{tpu_custom_call.1} parent=1 // pred_region
      %239 = vsyncadd [#allocation3], 0
      %s240 = sshll.u32 [#allocation2], 4
      %s241 = int_to_ptr.vmem [resolvable:$true] %s240
      %s242 = sshll.u32 %s2, 4
      %s243 = int_to_ptr.hbm [resolvable:$true] %s242
      %248 = dma.vmem_to_hbm [thread:$0]  %s241, 2048, %s243, [#allocation3], 256, 256, 16
    $region13: #{tpu_custom_call.1} parent=1 // pred_fallthru
      _
    // Predicated region
    $region14: #{tpu_custom_call.1} parent=1 // pred_check
      _
    $region15: #{tpu_custom_call.1} parent=1 // pred_check_branch
      %250 = sbr.rel (0) target = $region17
    $region16: #{tpu_custom_call.1} parent=1 // pred_region
      %252 = dma.done [#allocation3], 2048
    $region17: #{tpu_custom_call.1} parent=1 // pred_fallthru
      _
    %253 = vsyncpa [#allocation3], 1

</llo_original>
